<compile_context>
chip_gen: v6e
topology: v6e:2x2x1
jax: 0.10.0
libtpu: 0.0.40
codegen_flags: <defaults>
</compile_context>

<pallas_src>
import jax
import jax.numpy as jnp
from jax import lax
from jax.experimental import pallas as pl
from jax.experimental.pallas import tpu as pltpu

HIDDEN = 256


def _round_up(x, m):
    return ((x + m - 1) // m) * m


def _cdiv(a, b):
    return (a + b - 1) // b


def _critic_kernel(x_ref, w1_ref, b1_ref, w2_ref, b2_ref, w3_ref, b3_ref,
                   o_ref):
    # Layer 1: single MXU dot against the merged (obs+act, 256) bf16 weight.
    h1 = jnp.dot(x_ref[...].astype(jnp.bfloat16), w1_ref[...],
                 preferred_element_type=jnp.float32)
    h1 = jnp.maximum(h1 + b1_ref[...], 0.0)

    # Layer 2.
    h2 = jnp.dot(h1.astype(jnp.bfloat16), w2_ref[...],
                 preferred_element_type=jnp.float32)
    h2 = jnp.maximum(h2 + b2_ref[...], 0.0)

    # Layer 3 (256 -> 1) as (1,256) @ (tb,256)^T so the result is already a
    # lane-dense (1, tb) row -> full-width stores, no 1-lane masked vst.msk.
    q = lax.dot_general(
        w3_ref[...], h2.astype(jnp.bfloat16),
        dimension_numbers=(((1,), (1,)), ((), ())),
        preferred_element_type=jnp.float32)
    o_ref[...] = q + b3_ref[0]


def critic_forward(s, a, params, *, batch_tile=1024):
    """s: (B, obs_dim) f32, a: (B, act_dim) f32 -> (B, 1) f32 Q-values."""
    w1, b1, w2, b2, w3, b3 = params
    B, obs_dim = s.shape
    act_dim = a.shape[1]
    in_dim = obs_dim + act_dim
    assert w1.shape == (in_dim, HIDDEN)

    # torch.cat([s, a], dim=1): done once here as a trivial (B, obs+act) copy
    # so layer 1 is a single MXU dot in-kernel (the actual compute win).
    x = jnp.concatenate([s, a], axis=1)

    # Adaptive batch tiling: bound padding to <8 rows per tile and give the
    # "parallel" grid axis >= 2 (even) steps whenever B allows (v7x megacore).
    n_tiles = _cdiv(B, batch_tile)
    if B >= 16:
        n_tiles = max(n_tiles, 2)
        n_tiles += n_tiles % 2
    tb = _round_up(_cdiv(B, n_tiles), 8)
    b_pad = n_tiles * tb
    if b_pad != B:
        x = jnp.pad(x, ((0, b_pad - B), (0, 0)))

    flops = 2 * b_pad * (in_dim * HIDDEN + HIDDEN * HIDDEN + HIDDEN)
    bytes_accessed = (
        x.size * 4 + b_pad * 4                       # activations in / q out
        + (w1.size + w2.size + w3.size) * 2          # bf16 resident weights
        + (b1.size + b2.size + b3.size) * 4)         # f32 biases

    def resident(arr):  # whole array, same block every step -> stays in VMEM
        return pl.BlockSpec(arr.shape, lambda i: (0, 0))

    out = pl.pallas_call(
        _critic_kernel,
        out_shape=jax.ShapeDtypeStruct((n_tiles, tb), jnp.float32),
        grid=(n_tiles,),
        in_specs=[
            pl.BlockSpec((tb, in_dim), lambda i: (i, 0)),       # x batch tile
            resident(w1),                                       # (in_dim,256) bf16
            resident(b1),                                       # (1,256) f32
            resident(w2),                                       # (256,256) bf16
            resident(b2),                                       # (1,256) f32
            resident(w3),                                       # (1,256) bf16
            pl.BlockSpec(memory_space=pltpu.MemorySpace.SMEM),  # b3 scalar
        ],
        out_specs=pl.BlockSpec((1, tb), lambda i: (i, 0)),      # lane-dense row
        compiler_params=pltpu.CompilerParams(
            dimension_semantics=("parallel",)),
        cost_estimate=pl.CostEstimate(
            flops=flops, transcendentals=0, bytes_accessed=bytes_accessed),
    )(x, w1, b1, w2, b2, w3, b3)

    return out.reshape(-1)[:B, None]


def init_critic_params(key, obs_dim, act_dim, hidden=HIDDEN):
    """Mimics nn.Linear default init (U[-1/sqrt(fan_in), +1/sqrt(fan_in)])."""
    def linear(k, fan_in, fan_out):
        kw, kb = jax.random.split(k)
        bound = 1.0 / jnp.sqrt(fan_in)
        w = jax.random.uniform(kw, (fan_in, fan_out), jnp.float32, -bound, bound)
        b = jax.random.uniform(kb, (fan_out,), jnp.float32, -bound, bound)
        return w, b

    k1, k2, k3 = jax.random.split(key, 3)
    w1, b1 = linear(k1, obs_dim + act_dim, hidden)
    w2, b2 = linear(k2, hidden, hidden)
    w3, b3 = linear(k3, hidden, 1)

    # Kernel layout: merged layer-1 weight, MXU weights stored bf16, biases
    # f32; W3 stored as a bf16 row vector (its transpose) for the (1,tb) dot.
    return (
        w1.astype(jnp.bfloat16),                      # (obs+act, 256)
        b1.reshape(1, hidden),                        # (1, 256) f32
        w2.astype(jnp.bfloat16),                      # (256, 256)
        b2.reshape(1, hidden),                        # (1, 256) f32
        w3.reshape(1, hidden).astype(jnp.bfloat16),   # (1, 256) = W3^T
        b3,                                           # (1,) f32 (SMEM scalar)
    )


def critic_reference(s, a, params):
    """Pure-JAX reference mirroring the kernel's dtype strategy
    (bf16 MXU operands, f32 accumulation / bias / ReLU)."""
    w1, b1, w2, b2, w3, b3 = params
    x = jnp.concatenate([s, a], axis=1).astype(jnp.bfloat16)
    h1 = jnp.maximum(
        jnp.dot(x, w1, preferred_element_type=jnp.float32) + b1, 0.0)
    h2 = jnp.maximum(
        jnp.dot(h1.astype(jnp.bfloat16), w2,
                preferred_element_type=jnp.float32) + b2, 0.0)
    return jnp.dot(h2.astype(jnp.bfloat16), w3.T,
                   preferred_element_type=jnp.float32) + b3


if __name__ == "__main__":
    obs_dim, act_dim = 12, 4

    key = jax.random.PRNGKey(0)
    kp, kd = jax.random.split(key)
    params = init_critic_params(kp, obs_dim, act_dim)

    ok = True
    # 8: single-tile path; 37: 2-tile + batch-padding path; 128: clean 2-way split.
    for batch in (8, 37, 128):
        kd, k1, k2 = jax.random.split(kd, 3)
        s = jax.random.normal(k1, (batch, obs_dim), jnp.float32)
        a = jax.random.normal(k2, (batch, act_dim), jnp.float32)

        q = jax.block_until_ready(critic_forward(s, a, params))
        q_ref = critic_reference(s, a, params)

        ok &= q.shape == (batch, 1)
        ok &= bool(jnp.allclose(q, q_ref, atol=1e-3, rtol=1e-3))

    assert ok
    print("KERNEL_OK")
</pallas_src>

<mosaic_0001>
module attributes {stable_mosaic.version = 11 : i64} {
  func.func @_critic_kernel(%arg0: i32, %arg1: memref<8x16xf32, #tpu.memory_space<vmem>>, %arg2: memref<16x256xbf16, #tpu.memory_space<vmem>>, %arg3: memref<1x256xf32, #tpu.memory_space<vmem>>, %arg4: memref<256x256xbf16, #tpu.memory_space<vmem>>, %arg5: memref<1x256xf32, #tpu.memory_space<vmem>>, %arg6: memref<1x256xbf16, #tpu.memory_space<vmem>>, %arg7: memref<1xf32, #tpu.memory_space<smem>>, %arg8: memref<1x8xf32, #tpu.memory_space<vmem>>) attributes {dimension_semantics = [#tpu.dimension_semantics<parallel>], iteration_bounds = array<i64: 1>, scalar_prefetch = 0 : i64, scratch_operands = 0 : i64, tpu.core_type = #tpu.core_type<tc>, window_params = [{transform_indices = @transform_0, window_bounds = array<i64: 8, 16>}, {pipeline_mode = #tpu.pipeline_mode<synchronous>, transform_indices = @transform_1, window_bounds = array<i64: 16, 256>}, {pipeline_mode = #tpu.pipeline_mode<synchronous>, transform_indices = @transform_2, window_bounds = array<i64: 1, 256>}, {pipeline_mode = #tpu.pipeline_mode<synchronous>, transform_indices = @transform_3, window_bounds = array<i64: 256, 256>}, {pipeline_mode = #tpu.pipeline_mode<synchronous>, transform_indices = @transform_4, window_bounds = array<i64: 1, 256>}, {pipeline_mode = #tpu.pipeline_mode<synchronous>, transform_indices = @transform_5, window_bounds = array<i64: 1, 256>}, {transform_indices = @transform_6, window_bounds = array<i64: 1>}, {transform_indices = @transform_7, window_bounds = array<i64: 1, 8>}]} {
    %c0 = arith.constant 0 : index
    %c0_0 = arith.constant 0 : index
    %0 = vector.load %arg1[%c0, %c0_0] : memref<8x16xf32, #tpu.memory_space<vmem>>, vector<8x16xf32>
    %1 = arith.truncf %0 : vector<8x16xf32> to vector<8x16xbf16>
    %c0_1 = arith.constant 0 : index
    %c0_2 = arith.constant 0 : index
    %2 = vector.load %arg2[%c0_1, %c0_2] : memref<16x256xbf16, #tpu.memory_space<vmem>>, vector<16x256xbf16>
    %cst = arith.constant dense<0.000000e+00> : vector<8x256xf32>
    %3 = tpu.matmul %1, %2, %cst {dimension_numbers = #tpu.dot_dimension_numbers<[1], [0], [0], [1], [0, 0, 1, 1], [], []>} : vector<8x16xbf16>, vector<16x256xbf16>, vector<8x256xf32> -> vector<8x256xf32>
    %c0_3 = arith.constant 0 : index
    %c0_4 = arith.constant 0 : index
    %4 = vector.load %arg3[%c0_3, %c0_4] : memref<1x256xf32, #tpu.memory_space<vmem>>, vector<1x256xf32>
    %5 = vector.broadcast %4 : vector<1x256xf32> to vector<8x256xf32>
    %6 = arith.addf %3, %5 : vector<8x256xf32>
    %cst_5 = arith.constant 0.000000e+00 : f32
    %7 = vector.broadcast %cst_5 : f32 to vector<8x256xf32>
    %8 = arith.maximumf %6, %7 : vector<8x256xf32>
    %9 = arith.truncf %8 : vector<8x256xf32> to vector<8x256xbf16>
    %c0_6 = arith.constant 0 : index
    %c0_7 = arith.constant 0 : index
    %10 = vector.load %arg4[%c0_6, %c0_7] : memref<256x256xbf16, #tpu.memory_space<vmem>>, vector<256x256xbf16>
    %cst_8 = arith.constant dense<0.000000e+00> : vector<8x256xf32>
    %11 = tpu.matmul %9, %10, %cst_8 {dimension_numbers = #tpu.dot_dimension_numbers<[1], [0], [0], [1], [0, 0, 1, 1], [], []>} : vector<8x256xbf16>, vector<256x256xbf16>, vector<8x256xf32> -> vector<8x256xf32>
    %c0_9 = arith.constant 0 : index
    %c0_10 = arith.constant 0 : index
    %12 = vector.load %arg5[%c0_9, %c0_10] : memref<1x256xf32, #tpu.memory_space<vmem>>, vector<1x256xf32>
    %13 = vector.broadcast %12 : vector<1x256xf32> to vector<8x256xf32>
    %14 = arith.addf %11, %13 : vector<8x256xf32>
    %cst_11 = arith.constant 0.000000e+00 : f32
    %15 = vector.broadcast %cst_11 : f32 to vector<8x256xf32>
    %16 = arith.maximumf %14, %15 : vector<8x256xf32>
    %c0_12 = arith.constant 0 : index
    %c0_13 = arith.constant 0 : index
    %17 = vector.load %arg6[%c0_12, %c0_13] : memref<1x256xbf16, #tpu.memory_space<vmem>>, vector<1x256xbf16>
    %18 = arith.truncf %16 : vector<8x256xf32> to vector<8x256xbf16>
    %cst_14 = arith.constant dense<0.000000e+00> : vector<1x8xf32>
    %19 = tpu.matmul %17, %18, %cst_14 {dimension_numbers = #tpu.dot_dimension_numbers<[1], [1], [0], [0], [0, 0, 1, 0], [], []>} : vector<1x256xbf16>, vector<8x256xbf16>, vector<1x8xf32> -> vector<1x8xf32>
    %c0_15 = arith.constant 0 : index
    %20 = memref.load %arg7[%c0_15] : memref<1xf32, #tpu.memory_space<smem>>
    %21 = vector.broadcast %20 : f32 to vector<1x8xf32>
    %22 = arith.addf %19, %21 : vector<1x8xf32>
    %c0_16 = arith.constant 0 : index
    %c0_17 = arith.constant 0 : index
    %23 = vector.load %arg8[%c0_16, %c0_17] : memref<1x8xf32, #tpu.memory_space<vmem>>, vector<1x8xf32>
    tpu.vector_store %arg8[%c0_16, %c0_17], %22 {strides = array<i32>} : memref<1x8xf32, #tpu.memory_space<vmem>>, vector<1x8xf32>,
    return
  }
  func.func @transform_0(%arg0: i32) -> (i32, i32) {
    %c0_i32 = arith.constant 0 : i32
    %c0_i32_0 = arith.constant 0 : i32
    return %arg0, %c0_i32 : i32, i32
  }
  func.func @transform_1(%arg0: i32) -> (i32, i32) {
    %c0_i32 = arith.constant 0 : i32
    %c0_i32_0 = arith.constant 0 : i32
    %c0_i32_1 = arith.constant 0 : i32
    return %c0_i32, %c0_i32_0 : i32, i32
  }
  func.func @transform_2(%arg0: i32) -> (i32, i32) {
    %c0_i32 = arith.constant 0 : i32
    %c0_i32_0 = arith.constant 0 : i32
    %c0_i32_1 = arith.constant 0 : i32
    return %c0_i32, %c0_i32_0 : i32, i32
  }
  func.func @transform_3(%arg0: i32) -> (i32, i32) {
    %c0_i32 = arith.constant 0 : i32
    %c0_i32_0 = arith.constant 0 : i32
    %c0_i32_1 = arith.constant 0 : i32
    return %c0_i32, %c0_i32_0 : i32, i32
  }
  func.func @transform_4(%arg0: i32) -> (i32, i32) {
    %c0_i32 = arith.constant 0 : i32
    %c0_i32_0 = arith.constant 0 : i32
    %c0_i32_1 = arith.constant 0 : i32
    return %c0_i32, %c0_i32_0 : i32, i32
  }
  func.func @transform_5(%arg0: i32) -> (i32, i32) {
    %c0_i32 = arith.constant 0 : i32
    %c0_i32_0 = arith.constant 0 : i32
    %c0_i32_1 = arith.constant 0 : i32
    return %c0_i32, %c0_i32_0 : i32, i32
  }
  func.func @transform_6(%arg0: i32) -> i32 {
    %c0_i32 = arith.constant 0 : i32
    %c0_i32_0 = arith.constant 0 : i32
    return %c0_i32 : i32
  }
  func.func @transform_7(%arg0: i32) -> (i32, i32) {
    %c0_i32 = arith.constant 0 : i32
    %c0_i32_0 = arith.constant 0 : i32
    return %arg0, %c0_i32 : i32, i32
  }
}

</mosaic_0001>

<llo_original>
// kernel: tpu_custom_call.1
$region0: #{tpu_custom_call.1}
  #allocation0 [shape = 'u32[]', space=smem, size = 0x4, offset = 0x4, fixed_abs, tag = 'smem constant byte address 0x4 - core index']
  #allocation1 [shape = 'u32[144,128]{1,0:T(1,128)}', space=vmem, size = 0x12000, scoped, tag = 'internal scratch']
  #allocation2 [shape = 'f32[1]{0:T(128)S(6)}', space=smem, size = 0x200, scoped, tag = 'scoped memory for tpu_custom_call.1']
  %s0 = inlined_call_operand.hbm [shape: f32[8,16], index: 0, kind: input, shape index: {}]
  %s1 = inlined_call_operand.hbm [shape: bf16[16,256], index: 1, kind: input, shape index: {}]
  %s2 = inlined_call_operand.vmem [shape: f32[1,256], index: 2, kind: input, shape index: {}]
  %s3 = inlined_call_operand.hbm [shape: bf16[256,256], index: 3, kind: input, shape index: {}]
  %s4 = inlined_call_operand.vmem [shape: f32[1,256], index: 4, kind: input, shape index: {}]
  %s5 = inlined_call_operand.vmem [shape: bf16[1,256], index: 5, kind: input, shape index: {}]
  %s6 = inlined_call_operand.<no memory space> [shape: f32[1], index: 6, kind: input, shape index: {}]
  %s7 = inlined_call_operand.hbm [shape: f32[1,8], index: 7, kind: output, shape index: {}]
  %s8 = sld [smem:[#allocation0]]
  $region50: #{tpu_custom_call.1} parent=0
    _
  %s10 = ssub.s32 1, %s8
  %s11 = scalar_select 0, %s10, %s8
  %12 = sst [smem:[#allocation2]] %s6
  $region1: #{tpu_custom_call.1} parent=0
    #allocation3 [shape = 'u8[4096]{0}', space=vmem, size = 0x1000, scoped, tag = 'input window, operand 0, single buffered']
    #allocation4 [shape = 's32[1]{0}', space=sflag, size = 0x4, scoped, tag = 'scoped memory for tpu_custom_call.1']
    #allocation5 [shape = 's32[1]{0}', space=sflag, size = 0x4, scoped, tag = 'scoped memory for tpu_custom_call.1']
    #allocation6 [shape = 'u8[8192]{0}', space=vmem, size = 0x2000, scoped, tag = 'input window, operand 1, single buffered']
    #allocation7 [shape = 's32[1]{0}', space=sflag, size = 0x4, scoped, tag = 'scoped memory for tpu_custom_call.1']
    #allocation8 [shape = 'u8[131072]{0}', space=vmem, size = 0x20000, scoped, tag = 'input window, operand 3, single buffered']
    #allocation9 [shape = 'u8[512]{0}', space=vmem, size = 0x400, scoped, tag = 'output window, operand 0, single buffered']
    %13 = vsyncpa [#allocation4], 0
    %14 = vsyncpa [#allocation7], 0
    %15 = vsyncpa [#allocation5], 0
    // Predicated region
    $region2: #{tpu_custom_call.1} parent=1 // pred_check
      _
    $region3: #{tpu_custom_call.1} parent=1 // pred_check_branch
      %17 = sbr.rel (0) target = $region5
    $region4: #{tpu_custom_call.1} parent=1 // pred_region
      %s19 = ssub.s32 128, 128
      %20 = vsyncadd [#allocation4], %s19
      %s22 = sshll.u32 [#allocation3], 4
      %s23 = int_to_ptr.vmem [resolvable:$true] %s22
      %25 = dma.hbm_to_vmem [thread:$0]  %s0, 128, %s23, [#allocation4]
    $region5: #{tpu_custom_call.1} parent=1 // pred_fallthru
      _
    // Predicated region
    $region6: #{tpu_custom_call.1} parent=1 // pred_check
      _
    $region7: #{tpu_custom_call.1} parent=1 // pred_check_branch
      %27 = sbr.rel (0) target = $region9
    $region8: #{tpu_custom_call.1} parent=1 // pred_region
      %s29 = ssub.s32 256, 256
      %30 = vsyncadd [#allocation7], %s29
      %s31 = sshll.u32 [#allocation6], 4
      %s32 = int_to_ptr.vmem [resolvable:$true] %s31
      %37 = dma.hbm_to_vmem [thread:$0]  %s1, 256, %s32, [#allocation7], 128, 128, 8
    $region9: #{tpu_custom_call.1} parent=1 // pred_fallthru
      _
    // Predicated region
    $region10: #{tpu_custom_call.1} parent=1 // pred_check
      _
    $region11: #{tpu_custom_call.1} parent=1 // pred_check_branch
      %39 = sbr.rel (0) target = $region13
    $region12: #{tpu_custom_call.1} parent=1 // pred_region
      _
    $region13: #{tpu_custom_call.1} parent=1 // pred_fallthru
      _
    // Predicated region
    $region14: #{tpu_custom_call.1} parent=1 // pred_check
      _
    $region15: #{tpu_custom_call.1} parent=1 // pred_check_branch
      %41 = sbr.rel (0) target = $region17
    $region16: #{tpu_custom_call.1} parent=1 // pred_region
      %s43 = ssub.s32 4096, 4096
      %44 = vsyncadd [#allocation7], %s43
      %s45 = sshll.u32 [#allocation8], 4
      %s46 = int_to_ptr.vmem [resolvable:$true] %s45
      %51 = dma.hbm_to_vmem [thread:$0]  %s3, 4096, %s46, [#allocation7], 128, 128, 8
    $region17: #{tpu_custom_call.1} parent=1 // pred_fallthru
      _
    // Predicated region
    $region18: #{tpu_custom_call.1} parent=1 // pred_check
      _
    $region19: #{tpu_custom_call.1} parent=1 // pred_check_branch
      %53 = sbr.rel (0) target = $region21
    $region20: #{tpu_custom_call.1} parent=1 // pred_region
      _
    $region21: #{tpu_custom_call.1} parent=1 // pred_fallthru
      _
    // Predicated region
    $region22: #{tpu_custom_call.1} parent=1 // pred_check
      _
    $region23: #{tpu_custom_call.1} parent=1 // pred_check_branch
      %55 = sbr.rel (0) target = $region25
    $region24: #{tpu_custom_call.1} parent=1 // pred_region
      _
    $region25: #{tpu_custom_call.1} parent=1 // pred_fallthru
      _
    // Predicated region
    $region26: #{tpu_custom_call.1} parent=1 // pred_check
      _
    $region27: #{tpu_custom_call.1} parent=1 // pred_check_branch
      %57 = sbr.rel (0) target = $region29
    $region28: #{tpu_custom_call.1} parent=1 // pred_region
      _
    $region29: #{tpu_custom_call.1} parent=1 // pred_fallthru
      _
    // Predicated region
    $region30: #{tpu_custom_call.1} parent=1 // pred_check
      _
    $region31: #{tpu_custom_call.1} parent=1 // pred_check_branch
      %59 = sbr.rel (0) target = $region33
    $region32: #{tpu_custom_call.1} parent=1 // pred_region
      %60 = dma.done [#allocation4], 128
    $region33: #{tpu_custom_call.1} parent=1 // pred_fallthru
      _
    // Predicated region
    $region34: #{tpu_custom_call.1} parent=1 // pred_check
      _
    $region35: #{tpu_custom_call.1} parent=1 // pred_check_branch
      %62 = sbr.rel (0) target = $region37
    $region36: #{tpu_custom_call.1} parent=1 // pred_region
      %63 = dma.done [#allocation7], 256
    $region37: #{tpu_custom_call.1} parent=1 // pred_fallthru
      _
    // Predicated region
    $region38: #{tpu_custom_call.1} parent=1 // pred_check
      _
    $region39: #{tpu_custom_call.1} parent=1 // pred_check_branch
      %65 = sbr.rel (0) target = $region41
    $region40: #{tpu_custom_call.1} parent=1 // pred_region
      %66 = dma.done [#allocation7], 4096
    $region41: #{tpu_custom_call.1} parent=1 // pred_fallthru
      _
    %v68 = vld [vmem:[#allocation3] sm:$0xff]
    %v69 = vpack.c.bf16 %v68, %v68
    %v70 = vld [vmem:[#allocation6] sm:$0xff]
    %v71 = vld [vmem:[#allocation6 + $0x8] sm:$0xff]
    %v72 = vld [vmem:[%s2] sm:$0x3]
    %v74 = vlaneseq
    %v75 = vshrl.u32 %v74, 7
    %v76 = vsub.s32 0, %v75
    %v77 = vrot.slane %v72, %v76
    %v78 = vlaneseq
    %v79 = vshrl.u32 %v78, 7
    %v80 = vsub.s32 1, %v79
    %v81 = vrot.slane %v72, %v80
    %v86 = vunpack.c.l.b16 %v70
    %v87 = vunpack.c.h.b16 %v70
    %v88 = vunpack.c.l.b16 %v71
    %v89 = vunpack.c.h.b16 %v71
    %v90 = vpack.c.b16 %v88, %v86
    %v91 = vpack.c.b16 %v89, %v87
    %vm94 = vcmask 130048
    %v96 = vsel %vm94, %v69, 0
    %98 = vmatprep.subr.bf16.mxu0 0
    %99 = vmatpush1.bf16.msra.mxu0 0
    %100 = vmatprep.subr.bf16.mxu0 0
    %101 = vmatpush1.bf16.msra.mxu0 0
    %102 = vmatprep.subr.bf16.mxu0 0
    %103 = vmatpush1.bf16.msra.mxu0 0
    %104 = vmatprep.subr.bf16.mxu0 0
    %105 = vmatpush1.bf16.msra.mxu0 0
    %106 = vmatprep.subr.bf16.mxu0 0
    %107 = vmatpush1.bf16.msra.mxu0 0
    %108 = vmatprep.subr.bf16.mxu0 0
    %109 = vmatpush1.bf16.msra.mxu0 0
    %110 = vmatprep.subr.bf16.mxu0 0
    %111 = vmatpush1.bf16.msra.mxu0 0
    %112 = vmatprep.subr.bf16.mxu0 %v91
    %113 = vmatpush1.bf16.msra.mxu0 %v90
    %114 = vmatprep.subr.bf16.mxu0 0
    %115 = vmatpush2.bf16.msra.mxu0 0
    %116 = vmatprep.subr.bf16.mxu0 0
    %117 = vmatpush2.bf16.msra.mxu0 0
    %118 = vmatprep.subr.bf16.mxu0 0
    %119 = vmatpush2.bf16.msra.mxu0 0
    %120 = vmatprep.subr.bf16.mxu0 0
    %121 = vmatpush2.bf16.msra.mxu0 0
    %122 = vmatprep.subr.bf16.mxu0 0
    %123 = vmatpush2.bf16.msra.mxu0 0
    %124 = vmatprep.subr.bf16.mxu0 0
    %125 = vmatpush2.bf16.msra.mxu0 0
    %126 = vmatprep.subr.bf16.mxu0 0
    %127 = vmatpush2.bf16.msra.mxu0 0
    %128 = vmatprep.subr.bf16.mxu0 0
    %129 = vmatpush2.bf16.msra.mxu0 0
    %130 = vmatprep.mubr.bf16.mxu0 0
    %131 = vmatmul.mubr.bf16.gmra.mxu0 %v96
    %v132 = vpop.f32.mrf.mxu0
    %v133 = vadd.f32 %v77, %v132
    %v134 = vpop.f32.mrf.mxu0
    %v135 = vadd.f32 %v81, %v134
    %v136 = vpop.f32.mrf.mxu0
    %v137 = vpop.f32.mrf.mxu0
    %138 = vdwg.mxu0
    %v139 = vmax.f32 %v133, 0.0
    %v140 = vmax.f32 %v135, 0.0
    %v141 = vpack.c.bf16 %v139, %v139
    %v142 = vpack.c.bf16 %v140, %v140
    %v143 = vld [vmem:[#allocation8] sm:$0xff]
    %v144 = vld [vmem:[#allocation8 + $0x8] sm:$0xff]
    %v145 = vld [vmem:[#allocation8 + $0x10] sm:$0xff]
    %v146 = vld [vmem:[#allocation8 + $0x18] sm:$0xff]
    %v147 = vld [vmem:[#allocation8 + $0x20] sm:$0xff]
    %v148 = vld [vmem:[#allocation8 + $0x28] sm:$0xff]
    %v149 = vld [vmem:[#allocation8 + $0x30] sm:$0xff]
    %v150 = vld [vmem:[#allocation8 + $0x38] sm:$0xff]
    %v151 = vld [vmem:[#allocation8 + $0x40] sm:$0xff]
    %v152 = vld [vmem:[#allocation8 + $0x48] sm:$0xff]
    %v153 = vld [vmem:[#allocation8 + $0x50] sm:$0xff]
    %v154 = vld [vmem:[#allocation8 + $0x58] sm:$0xff]
    %v155 = vld [vmem:[#allocation8 + $0x60] sm:$0xff]
    %v156 = vld [vmem:[#allocation8 + $0x68] sm:$0xff]
    %v157 = vld [vmem:[#allocation8 + $0x70] sm:$0xff]
    %v158 = vld [vmem:[#allocation8 + $0x78] sm:$0xff]
    %v159 = vld [vmem:[#allocation8 + $0x80] sm:$0xff]
    %v160 = vld [vmem:[#allocation8 + $0x88] sm:$0xff]
    %v161 = vld [vmem:[#allocation8 + $0x90] sm:$0xff]
    %v162 = vld [vmem:[#allocation8 + $0x98] sm:$0xff]
    %v163 = vld [vmem:[#allocation8 + $0xa0] sm:$0xff]
    %v164 = vld [vmem:[#allocation8 + $0xa8] sm:$0xff]
    %v165 = vld [vmem:[#allocation8 + $0xb0] sm:$0xff]
    %v166 = vld [vmem:[#allocation8 + $0xb8] sm:$0xff]
    %v167 = vld [vmem:[#allocation8 + $0xc0] sm:$0xff]
    %v168 = vld [vmem:[#allocation8 + $0xc8] sm:$0xff]
    %v169 = vld [vmem:[#allocation8 + $0xd0] sm:$0xff]
    %v170 = vld [vmem:[#allocation8 + $0xd8] sm:$0xff]
    %v171 = vld [vmem:[#allocation8 + $0xe0] sm:$0xff]
    %v172 = vld [vmem:[#allocation8 + $0xe8] sm:$0xff]
    %v173 = vld [vmem:[#allocation8 + $0xf0] sm:$0xff]
    %v174 = vld [vmem:[#allocation8 + $0xf8] sm:$0xff]
    %v175 = vld [vmem:[%s4] sm:$0x3]
    %v177 = vlaneseq
    %v178 = vshrl.u32 %v177, 7
    %v179 = vsub.s32 0, %v178
    %v180 = vrot.slane %v175, %v179
    %v181 = vlaneseq
    %v182 = vshrl.u32 %v181, 7
    %v183 = vsub.s32 1, %v182
    %v184 = vrot.slane %v175, %v183
    %v219 = vunpack.c.l.b16 %v143
    %v220 = vunpack.c.h.b16 %v143
    %v221 = vunpack.c.l.b16 %v144
    %v222 = vunpack.c.h.b16 %v144
    %v223 = vunpack.c.l.b16 %v145
    %v224 = vunpack.c.h.b16 %v145
    %v225 = vunpack.c.l.b16 %v146
    %v226 = vunpack.c.h.b16 %v146
    %v227 = vunpack.c.l.b16 %v147
    %v228 = vunpack.c.h.b16 %v147
    %v229 = vunpack.c.l.b16 %v148
    %v230 = vunpack.c.h.b16 %v148
    %v231 = vunpack.c.l.b16 %v149
    %v232 = vunpack.c.h.b16 %v149
    %v233 = vunpack.c.l.b16 %v150
    %v234 = vunpack.c.h.b16 %v150
    %v235 = vunpack.c.l.b16 %v151
    %v236 = vunpack.c.h.b16 %v151
    %v237 = vunpack.c.l.b16 %v152
    %v238 = vunpack.c.h.b16 %v152
    %v239 = vunpack.c.l.b16 %v153
    %v240 = vunpack.c.h.b16 %v153
    %v241 = vunpack.c.l.b16 %v154
    %v242 = vunpack.c.h.b16 %v154
    %v243 = vunpack.c.l.b16 %v155
    %v244 = vunpack.c.h.b16 %v155
    %v245 = vunpack.c.l.b16 %v156
    %v246 = vunpack.c.h.b16 %v156
    %v247 = vunpack.c.l.b16 %v157
    %v248 = vunpack.c.h.b16 %v157
    %v249 = vunpack.c.l.b16 %v158
    %v250 = vunpack.c.h.b16 %v158
    %v251 = vunpack.c.l.b16 %v159
    %v252 = vunpack.c.h.b16 %v159
    %v253 = vunpack.c.l.b16 %v160
    %v254 = vunpack.c.h.b16 %v160
    %v255 = vunpack.c.l.b16 %v161
    %v256 = vunpack.c.h.b16 %v161
    %v257 = vunpack.c.l.b16 %v162
    %v258 = vunpack.c.h.b16 %v162
    %v259 = vunpack.c.l.b16 %v163
    %v260 = vunpack.c.h.b16 %v163
    %v261 = vunpack.c.l.b16 %v164
    %v262 = vunpack.c.h.b16 %v164
    %v263 = vunpack.c.l.b16 %v165
    %v264 = vunpack.c.h.b16 %v165
    %v265 = vunpack.c.l.b16 %v166
    %v266 = vunpack.c.h.b16 %v166
    %v267 = vunpack.c.l.b16 %v167
    %v268 = vunpack.c.h.b16 %v167
    %v269 = vunpack.c.l.b16 %v168
    %v270 = vunpack.c.h.b16 %v168
    %v271 = vunpack.c.l.b16 %v169
    %v272 = vunpack.c.h.b16 %v169
    %v273 = vunpack.c.l.b16 %v170
    %v274 = vunpack.c.h.b16 %v170
    %v275 = vunpack.c.l.b16 %v171
    %v276 = vunpack.c.h.b16 %v171
    %v277 = vunpack.c.l.b16 %v172
    %v278 = vunpack.c.h.b16 %v172
    %v279 = vunpack.c.l.b16 %v173
    %v280 = vunpack.c.h.b16 %v173
    %v281 = vunpack.c.l.b16 %v174
    %v282 = vunpack.c.h.b16 %v174
    %v283 = vpack.c.b16 %v221, %v219
    %v284 = vpack.c.b16 %v222, %v220
    %v285 = vpack.c.b16 %v225, %v223
    %v286 = vpack.c.b16 %v226, %v224
    %v287 = vpack.c.b16 %v229, %v227
    %v288 = vpack.c.b16 %v230, %v228
    %v289 = vpack.c.b16 %v233, %v231
    %v290 = vpack.c.b16 %v234, %v232
    %v291 = vpack.c.b16 %v237, %v235
    %v292 = vpack.c.b16 %v238, %v236
    %v293 = vpack.c.b16 %v241, %v239
    %v294 = vpack.c.b16 %v242, %v240
    %v295 = vpack.c.b16 %v245, %v243
    %v296 = vpack.c.b16 %v246, %v244
    %v297 = vpack.c.b16 %v249, %v247
    %v298 = vpack.c.b16 %v250, %v248
    %v299 = vpack.c.b16 %v253, %v251
    %v300 = vpack.c.b16 %v254, %v252
    %v301 = vpack.c.b16 %v257, %v255
    %v302 = vpack.c.b16 %v258, %v256
    %v303 = vpack.c.b16 %v261, %v259
    %v304 = vpack.c.b16 %v262, %v260
    %v305 = vpack.c.b16 %v265, %v263
    %v306 = vpack.c.b16 %v266, %v264
    %v307 = vpack.c.b16 %v269, %v267
    %v308 = vpack.c.b16 %v270, %v268
    %v309 = vpack.c.b16 %v273, %v271
    %v310 = vpack.c.b16 %v274, %v272
    %v311 = vpack.c.b16 %v277, %v275
    %v312 = vpack.c.b16 %v278, %v276
    %v313 = vpack.c.b16 %v281, %v279
    %v314 = vpack.c.b16 %v282, %v280
    %347 = vmatprep.subr.bf16.mxu0 %v298
    %348 = vmatpush1.bf16.msra.mxu0 %v297
    %349 = vmatprep.subr.bf16.mxu0 %v296
    %350 = vmatpush1.bf16.msra.mxu0 %v295
    %351 = vmatprep.subr.bf16.mxu0 %v294
    %352 = vmatpush1.bf16.msra.mxu0 %v293
    %353 = vmatprep.subr.bf16.mxu0 %v292
    %354 = vmatpush1.bf16.msra.mxu0 %v291
    %355 = vmatprep.subr.bf16.mxu0 %v290
    %356 = vmatpush1.bf16.msra.mxu0 %v289
    %357 = vmatprep.subr.bf16.mxu0 %v288
    %358 = vmatpush1.bf16.msra.mxu0 %v287
    %359 = vmatprep.subr.bf16.mxu0 %v286
    %360 = vmatpush1.bf16.msra.mxu0 %v285
    %361 = vmatprep.subr.bf16.mxu0 %v284
    %362 = vmatpush1.bf16.msra.mxu0 %v283
    %363 = vmatprep.subr.bf16.mxu0 %v314
    %364 = vmatpush2.bf16.msra.mxu0 %v313
    %365 = vmatprep.subr.bf16.mxu0 %v312
    %366 = vmatpush2.bf16.msra.mxu0 %v311
    %367 = vmatprep.subr.bf16.mxu0 %v310
    %368 = vmatpush2.bf16.msra.mxu0 %v309
    %369 = vmatprep.subr.bf16.mxu0 %v308
    %370 = vmatpush2.bf16.msra.mxu0 %v307
    %371 = vmatprep.subr.bf16.mxu0 %v306
    %372 = vmatpush2.bf16.msra.mxu0 %v305
    %373 = vmatprep.subr.bf16.mxu0 %v304
    %374 = vmatpush2.bf16.msra.mxu0 %v303
    %375 = vmatprep.subr.bf16.mxu0 %v302
    %376 = vmatpush2.bf16.msra.mxu0 %v301
    %377 = vmatprep.subr.bf16.mxu0 %v300
    %378 = vmatpush2.bf16.msra.mxu0 %v299
    %379 = vmatprep.mubr.bf16.mxu0 %v142
    %380 = vmatmul.mubr.bf16.gmra.mxu0 %v141
    %v381 = vpop.f32.mrf.mxu0
    %v382 = vadd.f32 %v180, %v381
    %v383 = vpop.f32.mrf.mxu0
    %v384 = vadd.f32 %v184, %v383
    %v385 = vpop.f32.mrf.mxu0
    %v386 = vpop.f32.mrf.mxu0
    %387 = vdwg.mxu0
    %v388 = vmax.f32 %v382, 0.0
    %v389 = vmax.f32 %v384, 0.0
    %v390 = vld [vmem:[%s5] sm:$0x3]
    %v391 = vpack.c.bf16 %v388, %v388
    %v392 = vpack.c.bf16 %v389, %v389
    %s393 = sld [smem:[#allocation2]]
    %v394 = vstv %s393
    %v397 = vunpack.c.l.s4 1966171168
    %v398 = vunpack.c.0.s8 %v397
    %v399 = vlaneseq
    %v400 = vshrl.u32 %v399, 7
    %v401 = vsub.s32 %v398, %v400
    %v402 = vrot.slane %v390, %v401
    %v403 = vcombine.high %v402, %v402
    %v405 = vunpack.c.l.s4 1966171168
    %v406 = vunpack.c.0.s8 %v405
    %v407 = vlaneseq
    %v408 = vshrl.u32 %v407, 7
    %v409 = vsub.s32 %v406, %v408
    %v410 = vrot.slane %v402, %v409
    %v412 = vunpack.c.l.s4 1966171168
    %v413 = vunpack.c.0.s8 %v412
    %v414 = vlaneseq
    %v415 = vshrl.u32 %v414, 7
    %v416 = vsub.s32 %v413, %v415
    %v417 = vrot.slane %v403, %v416
    %420 = vmatprep.subr.bf16.mxu0 0
    %421 = vmatpush1.bf16.xpose.msra.mxu0 0
    %422 = vmatprep.subr.bf16.mxu0 0
    %423 = vmatpush1.bf16.xpose.msra.mxu0 0
    %424 = vmatprep.subr.bf16.mxu0 0
    %425 = vmatpush1.bf16.xpose.msra.mxu0 0
    %426 = vmatprep.subr.bf16.mxu0 0
    %427 = vmatpush1.bf16.xpose.msra.mxu0 0
    %428 = vmatprep.subr.bf16.mxu0 0
    %429 = vmatpush1.bf16.xpose.msra.mxu0 0
    %430 = vmatprep.subr.bf16.mxu0 0
    %431 = vmatpush1.bf16.xpose.msra.mxu0 0
    %432 = vmatprep.subr.bf16.mxu0 0
    %433 = vmatpush1.bf16.xpose.msra.mxu0 0
    %434 = vmatprep.subr.bf16.mxu0 %v392
    %435 = vmatpush1.bf16.xpose.msra.mxu0 %v391
    %436 = vmatprep.subr.bf16.mxu0 0
    %437 = vmatpush2.bf16.xpose.msra.mxu0 0
    %438 = vmatprep.subr.bf16.mxu0 0
    %439 = vmatpush2.bf16.xpose.msra.mxu0 0
    %440 = vmatprep.subr.bf16.mxu0 0
    %441 = vmatpush2.bf16.xpose.msra.mxu0 0
    %442 = vmatprep.subr.bf16.mxu0 0
    %443 = vmatpush2.bf16.xpose.msra.mxu0 0
    %444 = vmatprep.subr.bf16.mxu0 0
    %445 = vmatpush2.bf16.xpose.msra.mxu0 0
    %446 = vmatprep.subr.bf16.mxu0 0
    %447 = vmatpush2.bf16.xpose.msra.mxu0 0
    %448 = vmatprep.subr.bf16.mxu0 0
    %449 = vmatpush2.bf16.xpose.msra.mxu0 0
    %450 = vmatprep.subr.bf16.mxu0 0
    %451 = vmatpush2.bf16.xpose.msra.mxu0 0
    %452 = vmatprep.mubr.bf16.mxu0 %v417
    %453 = vmatmul.mubr.bf16.gmra.mxu0 %v410
    %v454 = vpop.f32.mrf.mxu0
    %v455 = vadd.f32 %v394, %v454
    %v456 = vpop.f32.mrf.mxu0
    %v457 = vpop.f32.mrf.mxu0
    %v458 = vpop.f32.mrf.mxu0
    %459 = vdwg.mxu0
    %vm460 = vcmask 57344
    %461 = vst.msk [vmem:[#allocation9] sm:$0x1] %vm460, %v455
    // Predicated region
    $region42: #{tpu_custom_call.1} parent=1 // pred_check
      _
    $region43: #{tpu_custom_call.1} parent=1 // pred_check_branch
      %463 = sbr.rel (0) target = $region45
    $region44: #{tpu_custom_call.1} parent=1 // pred_region
      %s465 = ssub.s32 16, 16
      %466 = vsyncadd [#allocation5], %s465
      %s468 = sshll.u32 [#allocation9], 4
      %s469 = int_to_ptr.vmem [resolvable:$true] %s468
      %471 = dma.vmem_to_hbm [thread:$0]  %s469, 16, %s7, [#allocation5]
    $region45: #{tpu_custom_call.1} parent=1 // pred_fallthru
      _
    // Predicated region
    $region46: #{tpu_custom_call.1} parent=1 // pred_check
      _
    $region47: #{tpu_custom_call.1} parent=1 // pred_check_branch
      %473 = sbr.rel (0) target = $region49
    $region48: #{tpu_custom_call.1} parent=1 // pred_region
      %474 = dma.done [#allocation5], 16
    $region49: #{tpu_custom_call.1} parent=1 // pred_fallthru
      _
    %475 = vsyncpa [#allocation4], 1
    %476 = vsyncpa [#allocation7], 1
    %477 = vsyncpa [#allocation5], 1

</llo_original>
